<compile_context>
chip_gen: v5e
topology: v5e:2x2
jax: 0.10.0
libtpu: 0.0.40
codegen_flags: <defaults>
</compile_context>

<pallas_src>
import functools

import jax
import jax.numpy as jnp
from jax.experimental import pallas as pl
from jax.experimental.pallas import tpu as pltpu

K = 7      # kernel_size
PAD = 3    # padding for kernel_size == 7

TARGET_BLOCK_BYTES = 12 << 20   # Stage-1 per-block input budget
VMEM_LIMIT_BYTES = 48 << 20     # above v5e/v6e scoped defaults, under v7x 64 MiB


def _largest_divisor(n, cap):
    cap = max(1, min(n, cap))
    for d in range(cap, 0, -1):
        if n % d == 0:
            return d
    return 1


def _largest_divisor_multiple(n, cap, m):
    """Largest d <= cap with d % m == 0 and n % d == 0, else None."""
    d = (min(n, cap) // m) * m
    while d >= m:
        if n % d == 0:
            return d
        d -= m
    return None


# --------------------------- Stage 1: channel mean/max ----------------------
def _channel_pool_kernel(x_ref, mean_ref, max_ref, *, inv_c):
    # x_ref   : (nb, C, hw)   VMEM  lane-dense spatial chunk, full channel dim
    # mean_ref: (nb, 1, hw)   VMEM
    # max_ref : (nb, 1, hw)   VMEM
    C = x_ref.shape[1]
    ng, _ = divmod(C, 8)

    if ng > 0:
        # Sublane-group accumulation: full-vreg add/max over C//8 groups of 8
        # channels; the single cross-sublane reduce happens once at the end.
        x0 = x_ref[:, pl.ds(0, 8), :].astype(jnp.float32)
        s8, m8 = x0, x0
        if ng <= 64:
            for g in range(1, ng):                       # static unroll
                xg = x_ref[:, pl.ds(g * 8, 8), :].astype(jnp.float32)
                s8 = s8 + xg
                m8 = jnp.maximum(m8, xg)
        else:
            def body(g, carry):
                s_c, m_c = carry
                off = pl.multiple_of(g * 8, 8)
                xg = x_ref[:, pl.ds(off, 8), :].astype(jnp.float32)
                return s_c + xg, jnp.maximum(m_c, xg)
            s8, m8 = jax.lax.fori_loop(1, ng, body, (s8, m8), unroll=8)
        s = jnp.sum(s8, axis=1)      # single 8-wide cross-sublane reduce (XLU)
        m = jnp.max(m8, axis=1)
        start = ng * 8
    else:
        # C < 8: no full group; seed with channel 0.
        x0 = x_ref[:, 0, :].astype(jnp.float32)
        s, m = x0, x0
        start = 1

    # Remainder channels (< 8 of them): negligible single-sublane extractions.
    for cc in range(start, C):
        xc = x_ref[:, cc, :].astype(jnp.float32)
        s = s + xc
        m = jnp.maximum(m, xc)

    mean_ref[:, 0, :] = (s * inv_c).astype(mean_ref.dtype)
    max_ref[:, 0, :] = m.astype(max_ref.dtype)


# --------------------------- Stage 2: 7x7 conv + sigmoid --------------------
def _conv_sigmoid_kernel(w_ref, mean_ref, max_ref, o_ref, pmean_ref, pmax_ref):
    # w_ref    : (2*K*K,)                SMEM  flattened OIHW conv weight (O=1)
    # mean_ref : (nb2, H, W)             VMEM
    # max_ref  : (nb2, H, W)             VMEM
    # o_ref    : (nb2, 1, H, W)          VMEM
    # p*_ref   : (nb2, H+2P, W+2P)       VMEM  zero-padded halo scratch
    nb2, H, W = mean_ref.shape

    # Re-zero + fill the padded maps every step (a few dozen vector stores),
    # which keeps the N grid axis safe to run as "parallel" across TCs.
    pmean_ref[...] = jnp.zeros_like(pmean_ref)
    pmax_ref[...] = jnp.zeros_like(pmax_ref)
    pmean_ref[:, pl.ds(PAD, H), pl.ds(PAD, W)] = mean_ref[...].astype(jnp.float32)
    pmax_ref[:, pl.ds(PAD, H), pl.ds(PAD, W)] = max_ref[...].astype(jnp.float32)

    pads = (pmean_ref, pmax_ref)
    # 4 independent accumulators (per input channel x even/odd kernel row)
    # break the 98-deep dependent VALU chain.
    accs = [jnp.zeros((nb2, H, W), jnp.float32) for _ in range(4)]
    for c in range(2):
        for di in range(K):
            # One sublane-offset row-slab load per (c, di): 14 loads total.
            slab = pads[c][:, di:di + H, :]          # (nb2, H, W + 2*PAD)
            a = 2 * c + (di & 1)
            base = c * K * K + di * K
            for dj in range(K):
                # Static lane shift of the resident slab (XLU) + scalar FMA (VPU).
                accs[a] = accs[a] + w_ref[base + dj] * slab[:, :, dj:dj + W]
    out = (accs[0] + accs[1]) + (accs[2] + accs[3])
    o_ref[:, 0, :, :] = jax.nn.sigmoid(out).astype(o_ref.dtype)


# --------------------------- Wrapper ----------------------------------------
def spatial_attention(x, weight):
    """x: (N, C, H, W); weight: (1, 2, K, K) OIHW, no bias. Returns (N, 1, H, W)."""
    N, C, H, W = x.shape
    HW = H * W
    itemsize = jnp.dtype(x.dtype).itemsize

    # ---- Stage 1: fused channel mean/max (spatial-tiled, fully parallel) ----
    x_flat = x.reshape(N, C, HW)   # free relabel of contiguous NCHW; lane-dense

    per_image = C * HW * itemsize
    if per_image <= TARGET_BLOCK_BYTES:
        hw_t = HW
        nb = _largest_divisor(N, max(1, TARGET_BLOCK_BYTES // max(1, per_image)))
    else:
        nb = 1
        cap_lanes = max(128, (TARGET_BLOCK_BYTES // (C * itemsize)) // 128 * 128)
        hw_t = _largest_divisor_multiple(HW, cap_lanes, 128)
        if hw_t is None:
            # TODO(synk): HW has no multiple-of-128 divisor; fall back to a full
            # spatial block and rely on the raised VMEM limit.
            hw_t = HW

    mean_p, max_p = pl.pallas_call(
        functools.partial(_channel_pool_kernel, inv_c=1.0 / C),
        out_shape=(jax.ShapeDtypeStruct((N, 1, HW), jnp.float32),
                   jax.ShapeDtypeStruct((N, 1, HW), jnp.float32)),
        grid_spec=pltpu.PrefetchScalarGridSpec(
            num_scalar_prefetch=0,
            grid=(N // nb, HW // hw_t),
            in_specs=[pl.BlockSpec((nb, C, hw_t), lambda n, s: (n, 0, s))],
            out_specs=[pl.BlockSpec((nb, 1, hw_t), lambda n, s: (n, 0, s)),
                       pl.BlockSpec((nb, 1, hw_t), lambda n, s: (n, 0, s))],
        ),
        compiler_params=pltpu.CompilerParams(
            dimension_semantics=("parallel", "parallel"),
            vmem_limit_bytes=VMEM_LIMIT_BYTES,
        ),
    )(x_flat)

    mean_maps = mean_p.reshape(N, H, W)
    max_maps = max_p.reshape(N, H, W)

    # ---- Stage 2: 7x7 conv + sigmoid (tiny data volume, batched, parallel) --
    w_flat = weight.reshape(-1).astype(jnp.float32)   # (2*K*K,)

    # Cap nb2 so the 4 accumulators stay well under the 64-vreg budget.
    vregs_per_acc = -(-H // 8) * -(-W // 128)
    nb2_cap = max(1, 24 // max(1, 4 * vregs_per_acc))
    nb2 = _largest_divisor(N, nb2_cap)

    return pl.pallas_call(
        _conv_sigmoid_kernel,
        out_shape=jax.ShapeDtypeStruct((N, 1, H, W), x.dtype),
        grid_spec=pltpu.PrefetchScalarGridSpec(
            num_scalar_prefetch=0,
            grid=(N // nb2,),
            in_specs=[
                pl.BlockSpec(memory_space=pltpu.MemorySpace.SMEM),     # weights
                pl.BlockSpec((nb2, H, W), lambda n: (n, 0, 0)),        # mean maps
                pl.BlockSpec((nb2, H, W), lambda n: (n, 0, 0)),        # max maps
            ],
            out_specs=pl.BlockSpec((nb2, 1, H, W), lambda n: (n, 0, 0, 0)),
            scratch_shapes=[
                pltpu.VMEM((nb2, H + 2 * PAD, W + 2 * PAD), jnp.float32),
                pltpu.VMEM((nb2, H + 2 * PAD, W + 2 * PAD), jnp.float32),
            ],
        ),
        compiler_params=pltpu.CompilerParams(
            dimension_semantics=("parallel",),   # halo re-zeroed per step -> safe
        ),
    )(w_flat, mean_maps, max_maps)


def spatial_attention_ref(x, weight):
    """Pure-JAX reference (mirrors the PyTorch forward exactly)."""
    avg = jnp.mean(x, axis=1, keepdims=True)
    mx = jnp.max(x, axis=1, keepdims=True)
    cat = jnp.concatenate([avg, mx], axis=1)
    out = jax.lax.conv_general_dilated(
        cat, weight, window_strides=(1, 1),
        padding=((PAD, PAD), (PAD, PAD)),
        dimension_numbers=("NCHW", "OIHW", "NCHW"),
    )
    return jax.nn.sigmoid(out)


if __name__ == "__main__":
    key = jax.random.PRNGKey(0)
    kx, kw = jax.random.split(key)

    N, C, H, W = 2, 4, 16, 16
    x = jax.random.normal(kx, (N, C, H, W), dtype=jnp.float32)

    # Deterministic conv weight, shape (out=1, in=2, K, K), no bias
    # (synthetic init; PyTorch default would be kaiming-uniform).
    fan_in = 2 * K * K
    weight = jax.random.normal(kw, (1, 2, K, K), dtype=jnp.float32) / jnp.sqrt(fan_in)

    out = spatial_attention(x, weight)
    out = jax.block_until_ready(out)

    ref = spatial_attention_ref(x, weight)
    assert out.shape == (N, 1, H, W)
    assert jnp.allclose(out, ref, atol=1e-5, rtol=1e-5), (
        f"max abs err = {jnp.max(jnp.abs(out - ref))}"
    )

    print("KERNEL_OK")
</pallas_src>

<mosaic_0001>
module attributes {stable_mosaic.version = 11 : i64} {
  func.func @_channel_pool_kernel(%arg0: i32, %arg1: i32, %arg2: memref<2x4x256xf32, #tpu.memory_space<vmem>>, %arg3: memref<2x1x256xf32, #tpu.memory_space<vmem>>, %arg4: memref<2x1x256xf32, #tpu.memory_space<vmem>>) attributes {dimension_semantics = [#tpu.dimension_semantics<parallel>, #tpu.dimension_semantics<parallel>], iteration_bounds = array<i64: 1, 1>, scalar_prefetch = 0 : i64, scratch_operands = 0 : i64, tpu.core_type = #tpu.core_type<tc>, window_params = [{transform_indices = @transform_0, window_bounds = array<i64: 2, 4, 256>}, {transform_indices = @transform_1, window_bounds = array<i64: 2, 1, 256>}, {transform_indices = @transform_2, window_bounds = array<i64: 2, 1, 256>}]} {
    %c0 = arith.constant 0 : index
    %c0_0 = arith.constant 0 : index
    %c0_1 = arith.constant 0 : index
    %0 = vector.load %arg2[%c0, %c0_0, %c0_1] : memref<2x4x256xf32, #tpu.memory_space<vmem>>, vector<2x1x256xf32>
    %1 = vector.shape_cast %0 : vector<2x1x256xf32> to vector<2x256xf32>
    %c0_2 = arith.constant 0 : index
    %c1 = arith.constant 1 : index
    %c0_3 = arith.constant 0 : index
    %2 = vector.load %arg2[%c0_2, %c1, %c0_3] : memref<2x4x256xf32, #tpu.memory_space<vmem>>, vector<2x1x256xf32>
    %3 = vector.shape_cast %2 : vector<2x1x256xf32> to vector<2x256xf32>
    %4 = arith.addf %1, %3 : vector<2x256xf32>
    %5 = arith.maximumf %1, %3 : vector<2x256xf32>
    %c0_4 = arith.constant 0 : index
    %c2 = arith.constant 2 : index
    %c0_5 = arith.constant 0 : index
    %6 = vector.load %arg2[%c0_4, %c2, %c0_5] : memref<2x4x256xf32, #tpu.memory_space<vmem>>, vector<2x1x256xf32>
    %7 = vector.shape_cast %6 : vector<2x1x256xf32> to vector<2x256xf32>
    %8 = arith.addf %4, %7 : vector<2x256xf32>
    %9 = arith.maximumf %5, %7 : vector<2x256xf32>
    %c0_6 = arith.constant 0 : index
    %c3 = arith.constant 3 : index
    %c0_7 = arith.constant 0 : index
    %10 = vector.load %arg2[%c0_6, %c3, %c0_7] : memref<2x4x256xf32, #tpu.memory_space<vmem>>, vector<2x1x256xf32>
    %11 = vector.shape_cast %10 : vector<2x1x256xf32> to vector<2x256xf32>
    %12 = arith.addf %8, %11 : vector<2x256xf32>
    %13 = arith.maximumf %9, %11 : vector<2x256xf32>
    %cst = arith.constant 2.500000e-01 : f32
    %14 = vector.broadcast %cst : f32 to vector<2x256xf32>
    %15 = arith.mulf %12, %14 : vector<2x256xf32>
    %c0_8 = arith.constant 0 : index
    %c0_9 = arith.constant 0 : index
    %c0_10 = arith.constant 0 : index
    %16 = vector.load %arg3[%c0_8, %c0_9, %c0_10] : memref<2x1x256xf32, #tpu.memory_space<vmem>>, vector<2x1x256xf32>
    %17 = vector.shape_cast %16 : vector<2x1x256xf32> to vector<2x256xf32>
    %18 = vector.shape_cast %15 : vector<2x256xf32> to vector<2x1x256xf32>
    tpu.vector_store %arg3[%c0_8, %c0_9, %c0_10], %18 {strides = array<i32>} : memref<2x1x256xf32, #tpu.memory_space<vmem>>, vector<2x1x256xf32>,
    %c0_11 = arith.constant 0 : index
    %c0_12 = arith.constant 0 : index
    %c0_13 = arith.constant 0 : index
    %19 = vector.load %arg4[%c0_11, %c0_12, %c0_13] : memref<2x1x256xf32, #tpu.memory_space<vmem>>, vector<2x1x256xf32>
    %20 = vector.shape_cast %19 : vector<2x1x256xf32> to vector<2x256xf32>
    %21 = vector.shape_cast %13 : vector<2x256xf32> to vector<2x1x256xf32>
    tpu.vector_store %arg4[%c0_11, %c0_12, %c0_13], %21 {strides = array<i32>} : memref<2x1x256xf32, #tpu.memory_space<vmem>>, vector<2x1x256xf32>,
    return
  }
  func.func @transform_0(%arg0: i32, %arg1: i32) -> (i32, i32, i32) {
    %c0_i32 = arith.constant 0 : i32
    %c0_i32_0 = arith.constant 0 : i32
    return %arg0, %c0_i32, %arg1 : i32, i32, i32
  }
  func.func @transform_1(%arg0: i32, %arg1: i32) -> (i32, i32, i32) {
    %c0_i32 = arith.constant 0 : i32
    %c0_i32_0 = arith.constant 0 : i32
    return %arg0, %c0_i32, %arg1 : i32, i32, i32
  }
  func.func @transform_2(%arg0: i32, %arg1: i32) -> (i32, i32, i32) {
    %c0_i32 = arith.constant 0 : i32
    %c0_i32_0 = arith.constant 0 : i32
    return %arg0, %c0_i32, %arg1 : i32, i32, i32
  }
}

</mosaic_0001>

<llo_original>
// kernel: tpu_custom_call.1
$region0: #{tpu_custom_call.1}
  #allocation0 [shape = 'u32[]', space=smem, size = 0x4, offset = 0x4, fixed_abs, tag = 'smem constant byte address 0x4 - core index']
  #allocation1 [shape = 'u32[72,128]{1,0:T(1,128)}', space=vmem, size = 0x9000, scoped, tag = 'internal scratch']
  %s0 = inlined_call_operand.hbm [shape: f32[2,4,256], index: 0, kind: input, shape index: {}]
  %s1 = inlined_call_operand.hbm [shape: f32[2,1,256], index: 1, kind: output, shape index: {0}]
  %s2 = inlined_call_operand.hbm [shape: f32[2,1,256], index: 2, kind: output, shape index: {1}]
  %3 = xla_tuple %s1, %s2
  %s4 = sld [smem:[#allocation0]]
  $region26: #{tpu_custom_call.1} parent=0
    _
  %s6 = ssub.s32 1, %s4
  %s7 = scalar_select 0, %s6, %s4
  $region1: #{tpu_custom_call.1} parent=0
    #allocation2 [shape = 'u8[8192]{0}', space=vmem, size = 0x2000, scoped, tag = 'input window, operand 0, single buffered']
    #allocation3 [shape = 's32[1]{0}', space=sflag, size = 0x4, scoped, tag = 'scoped memory for tpu_custom_call.1']
    #allocation4 [shape = 's32[1]{0}', space=sflag, size = 0x4, scoped, tag = 'scoped memory for tpu_custom_call.1']
    #allocation5 [shape = 'u8[2048]{0}', space=vmem, size = 0x800, scoped, tag = 'output window, operand 0, single buffered']
    #allocation6 [shape = 'u8[2048]{0}', space=vmem, size = 0x800, scoped, tag = 'output window, operand 1, single buffered']
    #allocation7 [shape = 's32[1]{0}', space=sflag, size = 0x4, scoped, tag = 'scoped memory for tpu_custom_call.1']
    %8 = vsyncpa [#allocation3], 0
    %9 = vsyncpa [#allocation4], 0
    %10 = vsyncpa [#allocation7], 0
    // Predicated region
    $region2: #{tpu_custom_call.1} parent=1 // pred_check
      _
    $region3: #{tpu_custom_call.1} parent=1 // pred_check_branch
      %12 = sbr.rel (0) target = $region5
    $region4: #{tpu_custom_call.1} parent=1 // pred_region
      %14 = vsyncadd [#allocation3], 0
      %s15 = sshll.u32 %s0, 4
      %s16 = int_to_ptr.hbm [resolvable:$true] %s15
      %s17 = sshll.u32 [#allocation2], 4
      %s18 = int_to_ptr.vmem [resolvable:$true] %s17
      %23 = dma.hbm_to_vmem [thread:$0]  %s16, 256, %s18, [#allocation3], 128, 128, 8
    $region5: #{tpu_custom_call.1} parent=1 // pred_fallthru
      _
    // Predicated region
    $region6: #{tpu_custom_call.1} parent=1 // pred_check
      _
    $region7: #{tpu_custom_call.1} parent=1 // pred_check_branch
      %25 = sbr.rel (0) target = $region9
    $region8: #{tpu_custom_call.1} parent=1 // pred_region
      %27 = dma.done [#allocation3], 256
    $region9: #{tpu_custom_call.1} parent=1 // pred_fallthru
      _
    %v28 = vld [vmem:[#allocation2] ss:$4 sm:$0x3]
    %s29 = scalar_lea.vmem [#allocation2], 8
    %v30 = vld [vmem:[%s29] ss:$4 sm:$0x3]
    %s31 = scalar_lea.vmem [#allocation2], 1
    %v32 = vld [vmem:[%s31] ss:$4 sm:$0x3]
    %s33 = scalar_lea.vmem [#allocation2], 9
    %v34 = vld [vmem:[%s33] ss:$4 sm:$0x3]
    %v35 = vadd.f32 %v28, %v32
    %v36 = vadd.f32 %v30, %v34
    %v37 = vmax.f32 %v28, %v32
    %v38 = vmax.f32 %v30, %v34
    %s39 = scalar_lea.vmem [#allocation2], 2
    %v40 = vld [vmem:[%s39] ss:$4 sm:$0x3]
    %s41 = scalar_lea.vmem [#allocation2], 10
    %v42 = vld [vmem:[%s41] ss:$4 sm:$0x3]
    %v43 = vadd.f32 %v35, %v40
    %v44 = vadd.f32 %v36, %v42
    %v45 = vmax.f32 %v37, %v40
    %v46 = vmax.f32 %v38, %v42
    %s47 = scalar_lea.vmem [#allocation2], 3
    %v48 = vld [vmem:[%s47] ss:$4 sm:$0x3]
    %s49 = scalar_lea.vmem [#allocation2], 11
    %v50 = vld [vmem:[%s49] ss:$4 sm:$0x3]
    %v51 = vadd.f32 %v43, %v48
    %v52 = vadd.f32 %v44, %v50
    %v53 = vmax.f32 %v45, %v48
    %v54 = vmax.f32 %v46, %v50
    %v55 = vmul.f32 %v51, 0.25
    %v56 = vmul.f32 %v52, 0.25
    %v57 = vlaneseq
    %vm58 = vcmp.ge.s32.totalorder %v57, 0
    %vm59 = vcmp.lt.s32.totalorder %v57, 256
    %vm60 = vmand %vm58, %vm59
    %61 = vst.msk [vmem:[#allocation5] sm:$0x3] %vm60, %v55
    %62 = vst.msk [vmem:[#allocation5 + $0x2] sm:$0x3] %vm60, %v56
    %63 = vst.msk [vmem:[#allocation6] sm:$0x3] %vm60, %v53
    %64 = vst.msk [vmem:[#allocation6 + $0x2] sm:$0x3] %vm60, %v54
    // Predicated region
    $region10: #{tpu_custom_call.1} parent=1 // pred_check
      _
    $region11: #{tpu_custom_call.1} parent=1 // pred_check_branch
      %66 = sbr.rel (0) target = $region13
    $region12: #{tpu_custom_call.1} parent=1 // pred_region
      %68 = vsyncadd [#allocation4], 0
      %s69 = sshll.u32 [#allocation5], 4
      %s70 = int_to_ptr.vmem [resolvable:$true] %s69
      %s71 = sshll.u32 %s1, 4
      %s72 = int_to_ptr.hbm [resolvable:$true] %s71
      %77 = dma.vmem_to_hbm [thread:$0]  %s70, 64, %s72, [#allocation4], 32, 32, 2
    $region13: #{tpu_custom_call.1} parent=1 // pred_fallthru
      _
    // Predicated region
    $region14: #{tpu_custom_call.1} parent=1 // pred_check
      _
    $region15: #{tpu_custom_call.1} parent=1 // pred_check_branch
      %79 = sbr.rel (0) target = $region17
    $region16: #{tpu_custom_call.1} parent=1 // pred_region
      %81 = vsyncadd [#allocation7], 0
      %s82 = sshll.u32 [#allocation6], 4
      %s83 = int_to_ptr.vmem [resolvable:$true] %s82
      %s84 = sshll.u32 %s2, 4
      %s85 = int_to_ptr.hbm [resolvable:$true] %s84
      %90 = dma.vmem_to_hbm [thread:$0]  %s83, 64, %s85, [#allocation7], 32, 32, 2
    $region17: #{tpu_custom_call.1} parent=1 // pred_fallthru
      _
    // Predicated region
    $region18: #{tpu_custom_call.1} parent=1 // pred_check
      _
    $region19: #{tpu_custom_call.1} parent=1 // pred_check_branch
      %92 = sbr.rel (0) target = $region21
    $region20: #{tpu_custom_call.1} parent=1 // pred_region
      %94 = dma.done [#allocation4], 64
    $region21: #{tpu_custom_call.1} parent=1 // pred_fallthru
      _
    // Predicated region
    $region22: #{tpu_custom_call.1} parent=1 // pred_check
      _
    $region23: #{tpu_custom_call.1} parent=1 // pred_check_branch
      %96 = sbr.rel (0) target = $region25
    $region24: #{tpu_custom_call.1} parent=1 // pred_region
      %98 = dma.done [#allocation7], 64
    $region25: #{tpu_custom_call.1} parent=1 // pred_fallthru
      _
    %99 = vsyncpa [#allocation3], 1
    %100 = vsyncpa [#allocation4], 1
    %101 = vsyncpa [#allocation7], 1

</llo_original>
